<compile_context>
chip_gen: v7x
topology: tpu7x:2x2x1
jax: 0.10.0
libtpu: 0.0.40
codegen_flags: <defaults>
</compile_context>

<pallas_src>
import jax
import jax.numpy as jnp
from jax.experimental import pallas as pl
from jax.experimental.pallas import tpu as pltpu


# ----------------------------- kernel ---------------------------------------

def _mlp_kernel(x_ref, w1_ref, b1_ref, w2_ref, b2_ref, w3_ref, b3_ref, o_ref):
    # Matmul operands may be bf16 (MXU-native on v6e/v7x); accumulation is
    # always f32 via preferred_element_type; bias add + ReLU stay f32 on VPU.
    cdt = w1_ref.dtype
    h1 = jnp.dot(x_ref[...], w1_ref[...],
                 preferred_element_type=jnp.float32) + b1_ref[...]
    h1 = jnp.maximum(h1, 0.0)
    h2 = jnp.dot(h1.astype(cdt), w2_ref[...],
                 preferred_element_type=jnp.float32) + b2_ref[...]
    h2 = jnp.maximum(h2, 0.0)
    out = jnp.dot(h2.astype(cdt), w3_ref[...],
                  preferred_element_type=jnp.float32) + b3_ref[...]
    o_ref[...] = out.astype(o_ref.dtype)


# ----------------------------- helpers ---------------------------------------

_DEFAULT_SCOPED_VMEM = 32 * 1024 * 1024  # default scoped limit on v5e/v6e/v7x

# Minimum row (sublane) multiple per operand itemsize (packing rule).
_SUBLANE_MULT = {4: 8, 2: 16, 1: 32}


def _round_up(x, m):
    return (x + m - 1) // m * m


def _vmem_cap_bytes():
    """~75% of physical per-core VMEM; conservative 64 MiB if unknown."""
    try:
        info = pltpu.get_tpu_info()
        phys = int(getattr(info, "vmem_capacity_bytes", 0)) or 64 * 1024 * 1024
    except Exception:  # not a TPU / attribute mismatch -> be conservative
        phys = 64 * 1024 * 1024
    return max(int(phys * 0.75), _DEFAULT_SCOPED_VMEM)


def _maybe_vmem_limit(est_bytes, cap):
    """Return a vmem_limit_bytes value (or None) for CompilerParams."""
    if est_bytes <= _DEFAULT_SCOPED_VMEM:
        return None
    return int(min(max(int(est_bytes * 1.2), _DEFAULT_SCOPED_VMEM), cap))


# ----------------------------- wrapper ---------------------------------------

def k_steering_classifier_forward(
    x, w1, b1, w2, b2, w3, b3, *,
    tile_b=None, max_tile_b=512, compute_dtype=jnp.bfloat16,
):
    """x: (B, input_dim). Returns logits (B, num_labels) float32.

    Weights are (in, out); biases may be (out,) or (1, out).
    compute_dtype: matmul operand dtype (bf16 default; pass jnp.float32 for
    exact f32).  Accumulation / bias / ReLU are always f32.
    """
    B, D = x.shape
    H = w1.shape[1]
    L = w3.shape[1]
    LP = _round_up(L, 128)           # lane-dense classifier dim

    # Biases stay f32 (added after the f32 accumulation).
    b1 = jnp.asarray(b1, jnp.float32).reshape(1, H)
    b2 = jnp.asarray(b2, jnp.float32).reshape(1, H)
    b3 = jnp.asarray(b3, jnp.float32).reshape(1, L)
    w3 = jnp.asarray(w3)
    if LP != L:                       # zero-pad output columns -> unmasked vst
        w3 = jnp.pad(w3, ((0, 0), (0, LP - L)))
        b3 = jnp.pad(b3, ((0, 0), (0, LP - L)))

    if compute_dtype is None:
        compute_dtype = jnp.float32
    x = x.astype(compute_dtype)
    w1 = jnp.asarray(w1).astype(compute_dtype)
    w2 = jnp.asarray(w2).astype(compute_dtype)
    w3 = w3.astype(compute_dtype)

    itemsize = jnp.dtype(compute_dtype).itemsize
    sub_mult = _SUBLANE_MULT.get(itemsize, 8)
    d_pad = _round_up(D, 128)
    h_pad = _round_up(H, 128)
    vmem_cap = _vmem_cap_bytes()

    # Layout-accurate VMEM estimates (lane/sublane padded).
    def _weight_bytes(nbuf):
        wb = nbuf * (d_pad * h_pad + h_pad * h_pad + h_pad * LP) * itemsize
        bb = nbuf * 8 * (h_pad + h_pad + LP) * 4       # biases pad to 8 sublanes
        return wb + bb

    def _act_bytes(rows, nbuf):
        r = _round_up(rows, sub_mult)
        x_b = nbuf * r * d_pad * itemsize
        o_b = nbuf * r * LP * 4
        inter = r * h_pad * (2 * 4 + 2 * itemsize)     # h1,h2 f32 + cast copies
        return x_b + o_b + inter

    # ---- path selection ------------------------------------------------
    if tile_b is not None:
        assert tile_b % sub_mult == 0, (
            f"tile_b must be a multiple of {sub_mult} for {jnp.dtype(compute_dtype).name}")
        single_shot = tile_b >= B
    else:
        fits = _weight_bytes(1) + _act_bytes(B, 1) <= vmem_cap
        single_shot = (B <= max_tile_b) and fits
        if not single_shot:
            t = max(sub_mult, (max_tile_b // sub_mult) * sub_mult)
            tile_b = min(t, _round_up(B, sub_mult))

    if single_shot:
        # Whole arrays resident in VMEM: no grid loop, no per-step overhead.
        est = _weight_bytes(1) + _act_bytes(B, 1)
        limit = _maybe_vmem_limit(est, vmem_cap)
        cp = (pltpu.CompilerParams(vmem_limit_bytes=limit)
              if limit is not None else None)
        out = pl.pallas_call(
            _mlp_kernel,
            out_shape=jax.ShapeDtypeStruct((B, LP), jnp.float32),
            compiler_params=cp,
        )(x, w1, b1, w2, b2, w3, b3)
        return out[:, :L] if LP != L else out

    # -------- Gridded path (large batches): batch-parallel tiles. --------
    # Weights/biases use constant index maps -> fetched once; blocks are
    # still double-buffered by default, which the estimate accounts for.
    grid = (pl.cdiv(B, tile_b),)

    def _resident(shape):
        return pl.BlockSpec(shape, lambda i: (0, 0))

    est = _weight_bytes(2) + _act_bytes(tile_b, 2)
    limit = _maybe_vmem_limit(est, vmem_cap)
    cp_kwargs = dict(dimension_semantics=("parallel",))
    if limit is not None:
        cp_kwargs["vmem_limit_bytes"] = limit

    out = pl.pallas_call(
        _mlp_kernel,
        out_shape=jax.ShapeDtypeStruct((B, LP), jnp.float32),
        grid_spec=pltpu.PrefetchScalarGridSpec(
            num_scalar_prefetch=0,
            grid=grid,
            in_specs=[
                pl.BlockSpec((tile_b, D), lambda i: (i, 0)),  # x tile (streamed)
                _resident((D, H)),    # W1
                _resident((1, H)),    # b1
                _resident((H, H)),    # W2
                _resident((1, H)),    # b2
                _resident((H, LP)),   # W3 (lane-padded)
                _resident((1, LP)),   # b3 (lane-padded)
            ],
            out_specs=pl.BlockSpec((tile_b, LP), lambda i: (i, 0)),
        ),
        compiler_params=pltpu.CompilerParams(**cp_kwargs),
    )(x, w1, b1, w2, b2, w3, b3)
    return out[:, :L] if LP != L else out


# ----------------------------- test harness ----------------------------------

def _init_params(key, input_dim, hidden_dim, num_labels):
    """Deterministic synthetic parameters (shapes match the nn.Linear layers)."""
    k1, k2, k3, k4, k5, k6 = jax.random.split(key, 6)
    w1 = jax.random.normal(k1, (input_dim, hidden_dim), jnp.float32) * 0.05
    b1 = jax.random.normal(k2, (1, hidden_dim), jnp.float32) * 0.01
    w2 = jax.random.normal(k3, (hidden_dim, hidden_dim), jnp.float32) * 0.05
    b2 = jax.random.normal(k4, (1, hidden_dim), jnp.float32) * 0.01
    w3 = jax.random.normal(k5, (hidden_dim, num_labels), jnp.float32) * 0.05
    b3 = jax.random.normal(k6, (1, num_labels), jnp.float32) * 0.01
    return w1, b1, w2, b2, w3, b3


def _reference_forward(x, w1, b1, w2, b2, w3, b3):
    h1 = jnp.maximum(x @ w1 + b1, 0.0)
    h2 = jnp.maximum(h1 @ w2 + b2, 0.0)
    return h2 @ w3 + b3


if __name__ == "__main__":
    # Small shapes consistent with the module's forward: x is (batch, input_dim).
    batch, input_dim, hidden_dim, num_labels = 40, 32, 128, 4

    key = jax.random.PRNGKey(0)
    kx, kp = jax.random.split(key)
    x = jax.random.normal(kx, (batch, input_dim), jnp.float32)
    params = _init_params(kp, input_dim, hidden_dim, num_labels)

    ref = _reference_forward(x, *params)

    # 1) Default path (bf16 operands, f32 accumulation): single un-gridded call.
    logits = jax.block_until_ready(k_steering_classifier_forward(x, *params))
    assert logits.shape == (batch, num_labels)
    assert jnp.allclose(logits, ref, atol=3e-2, rtol=3e-2), "bf16 single-shot mismatch"

    # 2) f32 operands: exact single-shot check.
    logits_f32 = jax.block_until_ready(
        k_steering_classifier_forward(x, *params, compute_dtype=jnp.float32))
    assert jnp.allclose(logits_f32, ref, atol=1e-5, rtol=1e-5), "f32 single-shot mismatch"

    # 3) Gridded path with a ragged last block (B=40, tile_b=16 -> grid=3),
    #    f32 operands for an exact check of the grid/masking logic.
    logits_grid = jax.block_until_ready(
        k_steering_classifier_forward(x, *params, tile_b=16,
                                      compute_dtype=jnp.float32))
    assert logits_grid.shape == (batch, num_labels)
    assert jnp.allclose(logits_grid, ref, atol=1e-5, rtol=1e-5), "gridded f32 mismatch"

    # 4) Gridded path with default bf16 operands (tile_b=16 satisfies the
    #    bf16 16-row sublane minimum).
    logits_grid_bf16 = jax.block_until_ready(
        k_steering_classifier_forward(x, *params, tile_b=16))
    assert jnp.allclose(logits_grid_bf16, ref, atol=3e-2, rtol=3e-2), "gridded bf16 mismatch"

    print("KERNEL_OK")
</pallas_src>

<mosaic_0001>
module attributes {stable_mosaic.version = 11 : i64} {
  func.func @_mlp_kernel(%arg0: memref<40x32xbf16, #tpu.memory_space<vmem>>, %arg1: memref<32x128xbf16, #tpu.memory_space<vmem>>, %arg2: memref<1x128xf32, #tpu.memory_space<vmem>>, %arg3: memref<128x128xbf16, #tpu.memory_space<vmem>>, %arg4: memref<1x128xf32, #tpu.memory_space<vmem>>, %arg5: memref<128x128xbf16, #tpu.memory_space<vmem>>, %arg6: memref<1x128xf32, #tpu.memory_space<vmem>>, %arg7: memref<40x128xf32, #tpu.memory_space<vmem>>) attributes {dimension_semantics = [], scalar_prefetch = 0 : i64, scratch_operands = 0 : i64, tpu.core_type = #tpu.core_type<tc>} {
    %c0 = arith.constant 0 : index
    %c0_0 = arith.constant 0 : index
    %0 = vector.load %arg0[%c0, %c0_0] : memref<40x32xbf16, #tpu.memory_space<vmem>>, vector<40x32xbf16>
    %c0_1 = arith.constant 0 : index
    %c0_2 = arith.constant 0 : index
    %1 = vector.load %arg1[%c0_1, %c0_2] : memref<32x128xbf16, #tpu.memory_space<vmem>>, vector<32x128xbf16>
    %cst = arith.constant dense<0.000000e+00> : vector<40x128xf32>
    %2 = tpu.matmul %0, %1, %cst {dimension_numbers = #tpu.dot_dimension_numbers<[1], [0], [0], [1], [0, 0, 1, 1], [], []>} : vector<40x32xbf16>, vector<32x128xbf16>, vector<40x128xf32> -> vector<40x128xf32>
    %c0_3 = arith.constant 0 : index
    %c0_4 = arith.constant 0 : index
    %3 = vector.load %arg2[%c0_3, %c0_4] : memref<1x128xf32, #tpu.memory_space<vmem>>, vector<1x128xf32>
    %4 = vector.broadcast %3 : vector<1x128xf32> to vector<40x128xf32>
    %5 = arith.addf %2, %4 : vector<40x128xf32>
    %cst_5 = arith.constant 0.000000e+00 : f32
    %6 = vector.broadcast %cst_5 : f32 to vector<40x128xf32>
    %7 = arith.maximumf %5, %6 : vector<40x128xf32>
    %8 = arith.truncf %7 : vector<40x128xf32> to vector<40x128xbf16>
    %c0_6 = arith.constant 0 : index
    %c0_7 = arith.constant 0 : index
    %9 = vector.load %arg3[%c0_6, %c0_7] : memref<128x128xbf16, #tpu.memory_space<vmem>>, vector<128x128xbf16>
    %cst_8 = arith.constant dense<0.000000e+00> : vector<40x128xf32>
    %10 = tpu.matmul %8, %9, %cst_8 {dimension_numbers = #tpu.dot_dimension_numbers<[1], [0], [0], [1], [0, 0, 1, 1], [], []>} : vector<40x128xbf16>, vector<128x128xbf16>, vector<40x128xf32> -> vector<40x128xf32>
    %c0_9 = arith.constant 0 : index
    %c0_10 = arith.constant 0 : index
    %11 = vector.load %arg4[%c0_9, %c0_10] : memref<1x128xf32, #tpu.memory_space<vmem>>, vector<1x128xf32>
    %12 = vector.broadcast %11 : vector<1x128xf32> to vector<40x128xf32>
    %13 = arith.addf %10, %12 : vector<40x128xf32>
    %cst_11 = arith.constant 0.000000e+00 : f32
    %14 = vector.broadcast %cst_11 : f32 to vector<40x128xf32>
    %15 = arith.maximumf %13, %14 : vector<40x128xf32>
    %16 = arith.truncf %15 : vector<40x128xf32> to vector<40x128xbf16>
    %c0_12 = arith.constant 0 : index
    %c0_13 = arith.constant 0 : index
    %17 = vector.load %arg5[%c0_12, %c0_13] : memref<128x128xbf16, #tpu.memory_space<vmem>>, vector<128x128xbf16>
    %cst_14 = arith.constant dense<0.000000e+00> : vector<40x128xf32>
    %18 = tpu.matmul %16, %17, %cst_14 {dimension_numbers = #tpu.dot_dimension_numbers<[1], [0], [0], [1], [0, 0, 1, 1], [], []>} : vector<40x128xbf16>, vector<128x128xbf16>, vector<40x128xf32> -> vector<40x128xf32>
    %c0_15 = arith.constant 0 : index
    %c0_16 = arith.constant 0 : index
    %19 = vector.load %arg6[%c0_15, %c0_16] : memref<1x128xf32, #tpu.memory_space<vmem>>, vector<1x128xf32>
    %20 = vector.broadcast %19 : vector<1x128xf32> to vector<40x128xf32>
    %21 = arith.addf %18, %20 : vector<40x128xf32>
    %c0_17 = arith.constant 0 : index
    %c0_18 = arith.constant 0 : index
    %22 = vector.load %arg7[%c0_17, %c0_18] : memref<40x128xf32, #tpu.memory_space<vmem>>, vector<40x128xf32>
    tpu.vector_store %arg7[%c0_17, %c0_18], %21 {strides = array<i32>} : memref<40x128xf32, #tpu.memory_space<vmem>>, vector<40x128xf32>,
    return
  }
}

</mosaic_0001>

<llo_original>
// kernel: tpu_custom_call.1
$region0: #{tpu_custom_call.1}
  #allocation0 [shape = 'u32[]', space=smem, size = 0x4, offset = 0x4, fixed_abs, tag = 'smem constant byte address 0x4 - core index']
  #allocation1 [shape = 'u32[144,128]{1,0:T(1,128)}', space=vmem, size = 0x12000, scoped, tag = 'internal scratch']
  %s0 = inlined_call_operand.vmem [shape: bf16[40,32], index: 0, kind: input, shape index: {}]
  %s1 = inlined_call_operand.vmem [shape: bf16[32,128], index: 1, kind: input, shape index: {}]
  %s2 = inlined_call_operand.vmem [shape: f32[1,128], index: 2, kind: input, shape index: {}]
  %s3 = inlined_call_operand.hbm [shape: bf16[128,128], index: 3, kind: input, shape index: {}]
  %s4 = inlined_call_operand.vmem [shape: f32[1,128], index: 4, kind: input, shape index: {}]
  %s5 = inlined_call_operand.hbm [shape: bf16[128,128], index: 5, kind: input, shape index: {}]
  %s6 = inlined_call_operand.vmem [shape: f32[1,128], index: 6, kind: input, shape index: {}]
  %s7 = inlined_call_operand.hbm [shape: f32[40,128], index: 7, kind: output, shape index: {}]
  %s8 = sld [smem:[#allocation0]]
  $region46: #{tpu_custom_call.1} parent=0
    _
  %s10 = ssub.s32 1, %s8
  %s11 = scalar_select 0, %s10, %s8
  $region1: #{tpu_custom_call.1} parent=0
    #allocation2 [shape = 'u8[32768]{0}', space=vmem, size = 0x8000, scoped, tag = 'input window, operand 3, single buffered']
    #allocation3 [shape = 's32[1]{0}', space=sflag, size = 0x4, scoped, tag = 'scoped memory for tpu_custom_call.1']
    #allocation4 [shape = 's32[1]{0}', space=sflag, size = 0x4, scoped, tag = 'scoped memory for tpu_custom_call.1']
    #allocation5 [shape = 'u8[32768]{0}', space=vmem, size = 0x8000, scoped, tag = 'input window, operand 5, single buffered']
    #allocation6 [shape = 's32[1]{0}', space=sflag, size = 0x4, scoped, tag = 'scoped memory for tpu_custom_call.1']
    #allocation7 [shape = 'u8[20480]{0}', space=vmem, size = 0x5000, scoped, tag = 'output window, operand 0, single buffered']
    %12 = vsyncpa [#allocation3], 0
    %13 = vsyncpa [#allocation6], 0
    %14 = vsyncpa [#allocation4], 0
    // Predicated region
    $region2: #{tpu_custom_call.1} parent=1 // pred_check
      _
    $region3: #{tpu_custom_call.1} parent=1 // pred_check_branch
      %16 = sbr.rel (0) target = $region5
    $region4: #{tpu_custom_call.1} parent=1 // pred_region
      _
    $region5: #{tpu_custom_call.1} parent=1 // pred_fallthru
      _
    // Predicated region
    $region6: #{tpu_custom_call.1} parent=1 // pred_check
      _
    $region7: #{tpu_custom_call.1} parent=1 // pred_check_branch
      %18 = sbr.rel (0) target = $region9
    $region8: #{tpu_custom_call.1} parent=1 // pred_region
      _
    $region9: #{tpu_custom_call.1} parent=1 // pred_fallthru
      _
    // Predicated region
    $region10: #{tpu_custom_call.1} parent=1 // pred_check
      _
    $region11: #{tpu_custom_call.1} parent=1 // pred_check_branch
      %20 = sbr.rel (0) target = $region13
    $region12: #{tpu_custom_call.1} parent=1 // pred_region
      _
    $region13: #{tpu_custom_call.1} parent=1 // pred_fallthru
      _
    // Predicated region
    $region14: #{tpu_custom_call.1} parent=1 // pred_check
      _
    $region15: #{tpu_custom_call.1} parent=1 // pred_check_branch
      %22 = sbr.rel (0) target = $region17
    $region16: #{tpu_custom_call.1} parent=1 // pred_region
      %s24 = ssub.s32 1024, 1024
      %25 = vsyncadd [#allocation3], %s24
      %s26 = sshll.u32 [#allocation2], 4
      %s27 = int_to_ptr.vmem [resolvable:$true] %s26
      %32 = dma.hbm_to_vmem [thread:$0]  %s3, 1024, %s27, [#allocation3], 64, 64, 4
    $region17: #{tpu_custom_call.1} parent=1 // pred_fallthru
      _
    // Predicated region
    $region18: #{tpu_custom_call.1} parent=1 // pred_check
      _
    $region19: #{tpu_custom_call.1} parent=1 // pred_check_branch
      %34 = sbr.rel (0) target = $region21
    $region20: #{tpu_custom_call.1} parent=1 // pred_region
      _
    $region21: #{tpu_custom_call.1} parent=1 // pred_fallthru
      _
    // Predicated region
    $region22: #{tpu_custom_call.1} parent=1 // pred_check
      _
    $region23: #{tpu_custom_call.1} parent=1 // pred_check_branch
      %36 = sbr.rel (0) target = $region25
    $region24: #{tpu_custom_call.1} parent=1 // pred_region
      %s38 = ssub.s32 1024, 1024
      %39 = vsyncadd [#allocation6], %s38
      %s40 = sshll.u32 [#allocation5], 4
      %s41 = int_to_ptr.vmem [resolvable:$true] %s40
      %46 = dma.hbm_to_vmem [thread:$0]  %s5, 1024, %s41, [#allocation6], 64, 64, 4
    $region25: #{tpu_custom_call.1} parent=1 // pred_fallthru
      _
    // Predicated region
    $region26: #{tpu_custom_call.1} parent=1 // pred_check
      _
    $region27: #{tpu_custom_call.1} parent=1 // pred_check_branch
      %48 = sbr.rel (0) target = $region29
    $region28: #{tpu_custom_call.1} parent=1 // pred_region
      _
    $region29: #{tpu_custom_call.1} parent=1 // pred_fallthru
      _
    // Predicated region
    $region30: #{tpu_custom_call.1} parent=1 // pred_check
      _
    $region31: #{tpu_custom_call.1} parent=1 // pred_check_branch
      %50 = sbr.rel (0) target = $region33
    $region32: #{tpu_custom_call.1} parent=1 // pred_region
      %51 = dma.done [#allocation3], 1024
    $region33: #{tpu_custom_call.1} parent=1 // pred_fallthru
      _
    // Predicated region
    $region34: #{tpu_custom_call.1} parent=1 // pred_check
      _
    $region35: #{tpu_custom_call.1} parent=1 // pred_check_branch
      %53 = sbr.rel (0) target = $region37
    $region36: #{tpu_custom_call.1} parent=1 // pred_region
      %54 = dma.done [#allocation6], 1024
    $region37: #{tpu_custom_call.1} parent=1 // pred_fallthru
      _
    %v56 = vld [vmem:[%s0] sm:$0xf]
    %v57 = vld [vmem:[%s0 + $0x4] sm:$0xf]
    %v58 = vld [vmem:[%s0 + $0x8] sm:$0xf]
    %v59 = vld [vmem:[%s0 + $0xc] sm:$0xf]
    %v60 = vld [vmem:[%s0 + $0x10] sm:$0xf]
    %v61 = vld [vmem:[%s1] sm:$0xf]
    %v62 = vld [vmem:[%s1 + $0x4] sm:$0xf]
    %v63 = vld [vmem:[%s1 + $0x8] sm:$0xf]
    %v64 = vld [vmem:[%s1 + $0xc] sm:$0xf]
    %v65 = vld [vmem:[%s2] sm:$0x1]
    %v67 = vlaneseq
    %v68 = vshrl.u32 %v67, 7
    %v69 = vsub.s32 0, %v68
    %v70 = vrot.slane %v65, %v69
    %v77 = vunpack.c.l.b16 %v56
    %v78 = vunpack.c.l.b16 %v57
    %v79 = vunpack.c.l.b16 %v58
    %v80 = vunpack.c.l.b16 %v59
    %v81 = vunpack.c.l.b16 %v60
    %v82 = vpack.c.b16 %v78, %v77
    %v83 = vpack.c.b16 %v80, %v79
    %v84 = vpack.c.b16 %v81, %v81
    %v89 = vunpack.c.l.b16 %v61
    %v90 = vunpack.c.l.b16 %v62
    %v91 = vunpack.c.l.b16 %v63
    %v92 = vunpack.c.l.b16 %v64
    %v93 = vpack.c.b16 %v90, %v89
    %v94 = vpack.c.b16 %v92, %v91
    %vm97 = vcmask 261120
    %v99 = vsel %vm97, %v82, 0
    %v102 = vsel %vm97, %v83, 0
    %v105 = vsel %vm97, %v84, 0
    %107 = vmatprep.subr.bf16.mxu0 0
    %108 = vmatpush1.bf16.msra.mxu0 %v93
    %109 = vmatprep.subr.bf16.mxu0 0
    %110 = vmatpush1.bf16.msra.mxu0 %v94
    %111 = vmatprep.subr.bf16.mxu0 0
    %112 = vmatpush1.bf16.msra.mxu0 0
    %113 = vmatprep.subr.bf16.mxu0 0
    %114 = vmatpush1.bf16.msra.mxu0 0
    %115 = vmatprep.subr.bf16.mxu0 0
    %116 = vmatpush1.bf16.msra.mxu0 0
    %117 = vmatprep.subr.bf16.mxu0 0
    %118 = vmatpush1.bf16.msra.mxu0 0
    %119 = vmatprep.subr.bf16.mxu0 0
    %120 = vmatpush1.bf16.msra.mxu0 0
    %121 = vmatprep.subr.bf16.mxu0 0
    %122 = vmatpush1.bf16.msra.mxu0 0
    %123 = vmatprep.subr.bf16.mxu0 0
    %124 = vmatpush1.bf16.msra.mxu0 0
    %125 = vmatprep.subr.bf16.mxu0 0
    %126 = vmatpush1.bf16.msra.mxu0 0
    %127 = vmatprep.subr.bf16.mxu0 0
    %128 = vmatpush1.bf16.msra.mxu0 0
    %129 = vmatprep.subr.bf16.mxu0 0
    %130 = vmatpush1.bf16.msra.mxu0 0
    %131 = vmatprep.subr.bf16.mxu0 0
    %132 = vmatpush1.bf16.msra.mxu0 0
    %133 = vmatprep.subr.bf16.mxu0 0
    %134 = vmatpush1.bf16.msra.mxu0 0
    %135 = vmatprep.subr.bf16.mxu0 0
    %136 = vmatpush1.bf16.msra.mxu0 0
    %137 = vmatprep.subr.bf16.mxu0 0
    %138 = vmatpush1.bf16.msra.mxu0 0
    %139 = vmatprep.mubr.bf16.mxu0 0
    %140 = vmatmul.mubr.bf16.gmra.mrb[0].mxu0 %v99
    %v141 = vpop.f32.mrb[0].mxu0
    %v142 = vadd.f32 %v70, %v141
    %v143 = vpop.f32.mrb[0].mxu0
    %v144 = vpop.f32.mrb[0].mxu0
    %v145 = vadd.f32 %v70, %v144
    %v146 = vpop.f32.mrb[0].mxu0
    %147 = vmatprep.mubr.bf16.mxu0 0
    %148 = vmatmul.mubr.bf16.gmra.mrb[0].mxu0 %v102
    %v149 = vpop.f32.mrb[0].mxu0
    %v150 = vadd.f32 %v70, %v149
    %v151 = vpop.f32.mrb[0].mxu0
    %v152 = vpop.f32.mrb[0].mxu0
    %v153 = vadd.f32 %v70, %v152
    %v154 = vpop.f32.mrb[0].mxu0
    %155 = vmatprep.mubr.bf16.mxu0 0
    %156 = vmatmul.mubr.bf16.gmra.mrb[0].mxu0 %v105
    %v157 = vpop.f32.mrb[0].mxu0
    %v158 = vadd.f32 %v70, %v157
    %v159 = vpop.f32.mrb[0].mxu0
    %v160 = vpop.f32.mrb[0].mxu0
    %v161 = vpop.f32.mrb[0].mxu0
    %162 = vdwg.mxu0
    %v163 = vmax.f32 %v142, 0.0
    %v164 = vmax.f32 %v145, 0.0
    %v165 = vmax.f32 %v150, 0.0
    %v166 = vmax.f32 %v153, 0.0
    %v167 = vmax.f32 %v158, 0.0
    %v168 = vpack.c.bf16 %v164, %v163
    %v169 = vpack.c.bf16 %v166, %v165
    %v170 = vpack.c.bf16 %v167, %v167
    %v171 = vld [vmem:[#allocation2] sm:$0xf]
    %v172 = vld [vmem:[#allocation2 + $0x4] sm:$0xf]
    %v173 = vld [vmem:[#allocation2 + $0x8] sm:$0xf]
    %v174 = vld [vmem:[#allocation2 + $0xc] sm:$0xf]
    %v175 = vld [vmem:[#allocation2 + $0x10] sm:$0xf]
    %v176 = vld [vmem:[#allocation2 + $0x14] sm:$0xf]
    %v177 = vld [vmem:[#allocation2 + $0x18] sm:$0xf]
    %v178 = vld [vmem:[#allocation2 + $0x1c] sm:$0xf]
    %v179 = vld [vmem:[#allocation2 + $0x20] sm:$0xf]
    %v180 = vld [vmem:[#allocation2 + $0x24] sm:$0xf]
    %v181 = vld [vmem:[#allocation2 + $0x28] sm:$0xf]
    %v182 = vld [vmem:[#allocation2 + $0x2c] sm:$0xf]
    %v183 = vld [vmem:[#allocation2 + $0x30] sm:$0xf]
    %v184 = vld [vmem:[#allocation2 + $0x34] sm:$0xf]
    %v185 = vld [vmem:[#allocation2 + $0x38] sm:$0xf]
    %v186 = vld [vmem:[#allocation2 + $0x3c] sm:$0xf]
    %v187 = vld [vmem:[%s4] sm:$0x1]
    %v189 = vlaneseq
    %v190 = vshrl.u32 %v189, 7
    %v191 = vsub.s32 0, %v190
    %v192 = vrot.slane %v187, %v191
    %v210 = vunpack.c.l.b16 %v171
    %v211 = vunpack.c.l.b16 %v172
    %v212 = vunpack.c.l.b16 %v173
    %v213 = vunpack.c.l.b16 %v174
    %v214 = vunpack.c.l.b16 %v175
    %v215 = vunpack.c.l.b16 %v176
    %v216 = vunpack.c.l.b16 %v177
    %v217 = vunpack.c.l.b16 %v178
    %v218 = vunpack.c.l.b16 %v179
    %v219 = vunpack.c.l.b16 %v180
    %v220 = vunpack.c.l.b16 %v181
    %v221 = vunpack.c.l.b16 %v182
    %v222 = vunpack.c.l.b16 %v183
    %v223 = vunpack.c.l.b16 %v184
    %v224 = vunpack.c.l.b16 %v185
    %v225 = vunpack.c.l.b16 %v186
    %v226 = vpack.c.b16 %v211, %v210
    %v227 = vpack.c.b16 %v213, %v212
    %v228 = vpack.c.b16 %v215, %v214
    %v229 = vpack.c.b16 %v217, %v216
    %v230 = vpack.c.b16 %v219, %v218
    %v231 = vpack.c.b16 %v221, %v220
    %v232 = vpack.c.b16 %v223, %v222
    %v233 = vpack.c.b16 %v225, %v224
    %242 = vmatprep.subr.bf16.mxu0 0
    %243 = vmatpush1.bf16.msra.mxu0 %v226
    %244 = vmatprep.subr.bf16.mxu0 0
    %245 = vmatpush1.bf16.msra.mxu0 %v227
    %246 = vmatprep.subr.bf16.mxu0 0
    %247 = vmatpush1.bf16.msra.mxu0 %v228
    %248 = vmatprep.subr.bf16.mxu0 0
    %249 = vmatpush1.bf16.msra.mxu0 %v229
    %250 = vmatprep.subr.bf16.mxu0 0
    %251 = vmatpush1.bf16.msra.mxu0 %v230
    %252 = vmatprep.subr.bf16.mxu0 0
    %253 = vmatpush1.bf16.msra.mxu0 %v231
    %254 = vmatprep.subr.bf16.mxu0 0
    %255 = vmatpush1.bf16.msra.mxu0 %v232
    %256 = vmatprep.subr.bf16.mxu0 0
    %257 = vmatpush1.bf16.msra.mxu0 %v233
    %258 = vmatprep.subr.bf16.mxu0 0
    %259 = vmatpush1.bf16.msra.mxu0 0
    %260 = vmatprep.subr.bf16.mxu0 0
    %261 = vmatpush1.bf16.msra.mxu0 0
    %262 = vmatprep.subr.bf16.mxu0 0
    %263 = vmatpush1.bf16.msra.mxu0 0
    %264 = vmatprep.subr.bf16.mxu0 0
    %265 = vmatpush1.bf16.msra.mxu0 0
    %266 = vmatprep.subr.bf16.mxu0 0
    %267 = vmatpush1.bf16.msra.mxu0 0
    %268 = vmatprep.subr.bf16.mxu0 0
    %269 = vmatpush1.bf16.msra.mxu0 0
    %270 = vmatprep.subr.bf16.mxu0 0
    %271 = vmatpush1.bf16.msra.mxu0 0
    %272 = vmatprep.subr.bf16.mxu0 0
    %273 = vmatpush1.bf16.msra.mxu0 0
    %274 = vmatprep.mubr.bf16.mxu0 0
    %275 = vmatmul.mubr.bf16.gmra.mrb[0].mxu0 %v168
    %v276 = vpop.f32.mrb[0].mxu0
    %v277 = vadd.f32 %v192, %v276
    %v278 = vpop.f32.mrb[0].mxu0
    %v279 = vpop.f32.mrb[0].mxu0
    %v280 = vadd.f32 %v192, %v279
    %v281 = vpop.f32.mrb[0].mxu0
    %282 = vmatprep.mubr.bf16.mxu0 0
    %283 = vmatmul.mubr.bf16.gmra.mrb[0].mxu0 %v169
    %v284 = vpop.f32.mrb[0].mxu0
    %v285 = vadd.f32 %v192, %v284
    %v286 = vpop.f32.mrb[0].mxu0
    %v287 = vpop.f32.mrb[0].mxu0
    %v288 = vadd.f32 %v192, %v287
    %v289 = vpop.f32.mrb[0].mxu0
    %290 = vmatprep.mubr.bf16.mxu0 0
    %291 = vmatmul.mubr.bf16.gmra.mrb[0].mxu0 %v170
    %v292 = vpop.f32.mrb[0].mxu0
    %v293 = vadd.f32 %v192, %v292
    %v294 = vpop.f32.mrb[0].mxu0
    %v295 = vpop.f32.mrb[0].mxu0
    %v296 = vpop.f32.mrb[0].mxu0
    %297 = vdwg.mxu0
    %v298 = vmax.f32 %v277, 0.0
    %v299 = vmax.f32 %v280, 0.0
    %v300 = vmax.f32 %v285, 0.0
    %v301 = vmax.f32 %v288, 0.0
    %v302 = vmax.f32 %v293, 0.0
    %v303 = vpack.c.bf16 %v299, %v298
    %v304 = vpack.c.bf16 %v301, %v300
    %v305 = vpack.c.bf16 %v302, %v302
    %v306 = vld [vmem:[#allocation5] sm:$0xf]
    %v307 = vld [vmem:[#allocation5 + $0x4] sm:$0xf]
    %v308 = vld [vmem:[#allocation5 + $0x8] sm:$0xf]
    %v309 = vld [vmem:[#allocation5 + $0xc] sm:$0xf]
    %v310 = vld [vmem:[#allocation5 + $0x10] sm:$0xf]
    %v311 = vld [vmem:[#allocation5 + $0x14] sm:$0xf]
    %v312 = vld [vmem:[#allocation5 + $0x18] sm:$0xf]
    %v313 = vld [vmem:[#allocation5 + $0x1c] sm:$0xf]
    %v314 = vld [vmem:[#allocation5 + $0x20] sm:$0xf]
    %v315 = vld [vmem:[#allocation5 + $0x24] sm:$0xf]
    %v316 = vld [vmem:[#allocation5 + $0x28] sm:$0xf]
    %v317 = vld [vmem:[#allocation5 + $0x2c] sm:$0xf]
    %v318 = vld [vmem:[#allocation5 + $0x30] sm:$0xf]
    %v319 = vld [vmem:[#allocation5 + $0x34] sm:$0xf]
    %v320 = vld [vmem:[#allocation5 + $0x38] sm:$0xf]
    %v321 = vld [vmem:[#allocation5 + $0x3c] sm:$0xf]
    %v322 = vld [vmem:[%s6] sm:$0x1]
    %v324 = vlaneseq
    %v325 = vshrl.u32 %v324, 7
    %v326 = vsub.s32 0, %v325
    %v327 = vrot.slane %v322, %v326
    %v345 = vunpack.c.l.b16 %v306
    %v346 = vunpack.c.l.b16 %v307
    %v347 = vunpack.c.l.b16 %v308
    %v348 = vunpack.c.l.b16 %v309
    %v349 = vunpack.c.l.b16 %v310
    %v350 = vunpack.c.l.b16 %v311
    %v351 = vunpack.c.l.b16 %v312
    %v352 = vunpack.c.l.b16 %v313
    %v353 = vunpack.c.l.b16 %v314
    %v354 = vunpack.c.l.b16 %v315
    %v355 = vunpack.c.l.b16 %v316
    %v356 = vunpack.c.l.b16 %v317
    %v357 = vunpack.c.l.b16 %v318
    %v358 = vunpack.c.l.b16 %v319
    %v359 = vunpack.c.l.b16 %v320
    %v360 = vunpack.c.l.b16 %v321
    %v361 = vpack.c.b16 %v346, %v345
    %v362 = vpack.c.b16 %v348, %v347
    %v363 = vpack.c.b16 %v350, %v349
    %v364 = vpack.c.b16 %v352, %v351
    %v365 = vpack.c.b16 %v354, %v353
    %v366 = vpack.c.b16 %v356, %v355
    %v367 = vpack.c.b16 %v358, %v357
    %v368 = vpack.c.b16 %v360, %v359
    %377 = vmatprep.subr.bf16.mxu0 0
    %378 = vmatpush1.bf16.msra.mxu0 %v361
    %379 = vmatprep.subr.bf16.mxu0 0
    %380 = vmatpush1.bf16.msra.mxu0 %v362
    %381 = vmatprep.subr.bf16.mxu0 0
    %382 = vmatpush1.bf16.msra.mxu0 %v363
    %383 = vmatprep.subr.bf16.mxu0 0
    %384 = vmatpush1.bf16.msra.mxu0 %v364
    %385 = vmatprep.subr.bf16.mxu0 0
    %386 = vmatpush1.bf16.msra.mxu0 %v365
    %387 = vmatprep.subr.bf16.mxu0 0
    %388 = vmatpush1.bf16.msra.mxu0 %v366
    %389 = vmatprep.subr.bf16.mxu0 0
    %390 = vmatpush1.bf16.msra.mxu0 %v367
    %391 = vmatprep.subr.bf16.mxu0 0
    %392 = vmatpush1.bf16.msra.mxu0 %v368
    %393 = vmatprep.subr.bf16.mxu0 0
    %394 = vmatpush1.bf16.msra.mxu0 0
    %395 = vmatprep.subr.bf16.mxu0 0
    %396 = vmatpush1.bf16.msra.mxu0 0
    %397 = vmatprep.subr.bf16.mxu0 0
    %398 = vmatpush1.bf16.msra.mxu0 0
    %399 = vmatprep.subr.bf16.mxu0 0
    %400 = vmatpush1.bf16.msra.mxu0 0
    %401 = vmatprep.subr.bf16.mxu0 0
    %402 = vmatpush1.bf16.msra.mxu0 0
    %403 = vmatprep.subr.bf16.mxu0 0
    %404 = vmatpush1.bf16.msra.mxu0 0
    %405 = vmatprep.subr.bf16.mxu0 0
    %406 = vmatpush1.bf16.msra.mxu0 0
    %407 = vmatprep.subr.bf16.mxu0 0
    %408 = vmatpush1.bf16.msra.mxu0 0
    %409 = vmatprep.mubr.bf16.mxu0 0
    %410 = vmatmul.mubr.bf16.gmra.mrb[0].mxu0 %v303
    %v411 = vpop.f32.mrb[0].mxu0
    %v412 = vadd.f32 %v327, %v411
    %v413 = vpop.f32.mrb[0].mxu0
    %v414 = vpop.f32.mrb[0].mxu0
    %v415 = vadd.f32 %v327, %v414
    %v416 = vpop.f32.mrb[0].mxu0
    %417 = vmatprep.mubr.bf16.mxu0 0
    %418 = vmatmul.mubr.bf16.gmra.mrb[0].mxu0 %v304
    %v419 = vpop.f32.mrb[0].mxu0
    %v420 = vadd.f32 %v327, %v419
    %v421 = vpop.f32.mrb[0].mxu0
    %v422 = vpop.f32.mrb[0].mxu0
    %v423 = vadd.f32 %v327, %v422
    %v424 = vpop.f32.mrb[0].mxu0
    %425 = vmatprep.mubr.bf16.mxu0 0
    %426 = vmatmul.mubr.bf16.gmra.mrb[0].mxu0 %v305
    %v427 = vpop.f32.mrb[0].mxu0
    %v428 = vadd.f32 %v327, %v427
    %v429 = vpop.f32.mrb[0].mxu0
    %v430 = vpop.f32.mrb[0].mxu0
    %v431 = vpop.f32.mrb[0].mxu0
    %432 = vdwg.mxu0
    %433 = vst [vmem:[#allocation7] sm:$0xff] %v412
    %434 = vst [vmem:[#allocation7 + $0x8] sm:$0xff] %v415
    %435 = vst [vmem:[#allocation7 + $0x10] sm:$0xff] %v420
    %436 = vst [vmem:[#allocation7 + $0x18] sm:$0xff] %v423
    %437 = vst [vmem:[#allocation7 + $0x20] sm:$0xff] %v428
    // Predicated region
    $region38: #{tpu_custom_call.1} parent=1 // pred_check
      _
    $region39: #{tpu_custom_call.1} parent=1 // pred_check_branch
      %439 = sbr.rel (0) target = $region41
    $region40: #{tpu_custom_call.1} parent=1 // pred_region
      %s441 = ssub.s32 640, 640
      %442 = vsyncadd [#allocation4], %s441
      %s443 = sshll.u32 [#allocation7], 4
      %s444 = int_to_ptr.vmem [resolvable:$true] %s443
      %449 = dma.vmem_to_hbm [thread:$0]  %s444, 640, %s7, [#allocation4], 128, 128, 8
    $region41: #{tpu_custom_call.1} parent=1 // pred_fallthru
      _
    // Predicated region
    $region42: #{tpu_custom_call.1} parent=1 // pred_check
      _
    $region43: #{tpu_custom_call.1} parent=1 // pred_check_branch
      %451 = sbr.rel (0) target = $region45
    $region44: #{tpu_custom_call.1} parent=1 // pred_region
      %452 = dma.done [#allocation4], 640
    $region45: #{tpu_custom_call.1} parent=1 // pred_fallthru
      _
    %453 = vsyncpa [#allocation3], 1
    %454 = vsyncpa [#allocation6], 1
    %455 = vsyncpa [#allocation4], 1

</llo_original>
